<compile_context>
chip_gen: v7x
topology: tpu7x:2x2x1
jax: 0.10.0
libtpu: 0.0.40
codegen_flags: <defaults>
</compile_context>

<pallas_src>
import functools

import jax
import jax.numpy as jnp
from jax.experimental import pallas as pl
from jax.experimental.pallas import tpu as pltpu

_LANE = 128


def _round_up(n, m):
    return (n + m - 1) // m * m


# --------------------------------------------------------------------------- #
# Kernel: one (batch_tile, layer) grid step.
# --------------------------------------------------------------------------- #
def _mlp_layer_kernel(x_ref, w_ref, b_ref, o_ref, h_ref):
    """x_ref : (TM, D_pad)        compute_dtype, resident per batch tile
    w_ref : (1, D_pad, D_pad)   compute_dtype, streamed per layer (double-buffered)
    b_ref : (1, 1, D_pad)       float32,       streamed per layer
    o_ref : (TM, D_out_pad)     float32, resident per batch tile, written at last layer
    h_ref : (TM, D_pad)         compute_dtype VMEM scratch carrying the activation
    """
    layer = pl.program_id(1)
    n_layers = pl.num_programs(1)

    @pl.when(layer == 0)
    def _():
        h_ref[...] = x_ref[...]

    # MXU matmul with f32 accumulation; bias add stays f32 (VPU filler under MXU).
    y = jnp.dot(h_ref[...], w_ref[0], preferred_element_type=jnp.float32) + b_ref[0]

    @pl.when(layer != n_layers - 1)
    def _():
        # Hidden layers: ReLU, carry activation in compute_dtype scratch.
        # Padded *columns* stay exactly zero (zero W cols + zero b cols -> 0 -> ReLU 0).
        h_ref[...] = jnp.maximum(y, 0.0).astype(h_ref.dtype)

    @pl.when(layer == n_layers - 1)
    def _():
        # Last layer: no activation.  Slice is lane-aligned (multiple of 128).
        o_ref[...] = y[:, : o_ref.shape[1]]


# --------------------------------------------------------------------------- #
# One-time parameter preparation (OUTSIDE the per-call forward).
# --------------------------------------------------------------------------- #
def prepare_mlp_params(params, compute_dtype=jnp.bfloat16):
    """Zero-pad every (W, b) to a common square lane-aligned size, cast W to the
    MXU input dtype, and stack.  Do this ONCE at model setup; the jitted forward
    consumes the prepared arrays directly (no per-call re-pad / re-cast)."""
    dims = [params[0][0].shape[0]] + [w.shape[1] for (w, _) in params]
    d_pad = max(_round_up(d, _LANE) for d in dims)
    ws, bs = [], []
    for (w, b) in params:
        di, do = w.shape
        wp = jnp.zeros((d_pad, d_pad), compute_dtype).at[:di, :do].set(
            w.astype(compute_dtype))
        bp = jnp.zeros((1, d_pad), jnp.float32).at[:, :do].set(
            jnp.asarray(b, jnp.float32).reshape(1, do))
        ws.append(wp)
        bs.append(bp)
    w_stk = jnp.stack(ws)   # [L, D_pad, D_pad], compute_dtype
    b_stk = jnp.stack(bs)   # [L, 1, D_pad],     float32
    meta = dict(in_dim=dims[0], out_dim=dims[-1], d_pad=d_pad)
    return w_stk, b_stk, meta


# --------------------------------------------------------------------------- #
# Forward.
# --------------------------------------------------------------------------- #
@functools.partial(jax.jit, static_argnames=("out_dim", "compute_dtype", "tm_max"))
def mlp_net_forward(x, w_stk, b_stk, *, out_dim, compute_dtype=jnp.bfloat16,
                    tm_max=256):
    m, in_dim = x.shape
    n_layers, d_pad, _ = w_stk.shape
    d_out_pad = _round_up(out_dim, _LANE)

    # bf16 vreg holds [16,128] -> pad batch to 16 for bf16, 8 for f32.
    m_align = 16 if jnp.dtype(compute_dtype) == jnp.dtype(jnp.bfloat16) else 8
    tm = min(tm_max, _round_up(m, m_align))
    m_pad = _round_up(m, tm)
    grid_m = m_pad // tm

    # Padded batch ROWS are not zero after layer 0 (0*W + b = b propagates
    # through ReLU); they are dead work and are sliced off at the end.
    x_p = jnp.zeros((m_pad, d_pad), compute_dtype).at[:m, :in_dim].set(
        x.astype(compute_dtype))

    cd_bytes = jnp.dtype(compute_dtype).itemsize
    working_set = (
        2 * d_pad * d_pad * cd_bytes      # streamed W tile, double-buffered
        + 2 * d_pad * 4                   # streamed bias tile, double-buffered
        + 2 * tm * d_pad * cd_bytes       # x tile, double-buffered
        + 2 * tm * d_out_pad * 4          # out tile, double-buffered
        + tm * d_pad * cd_bytes           # activation scratch
    )
    # Explicit scoped-VMEM budget; cap at 64 MiB so the same plan fits v7x.
    vmem_limit = int(min(max(2 * working_set + (1 << 20), 16 << 20), 64 << 20))

    flops = 2 * m_pad * d_pad * d_pad * n_layers
    bytes_accessed = (x_p.size * cd_bytes
                      + grid_m * (w_stk.size * cd_bytes + b_stk.size * 4)
                      + m_pad * d_out_pad * 4)

    out_pad = pl.pallas_call(
        _mlp_layer_kernel,
        out_shape=jax.ShapeDtypeStruct((m_pad, d_out_pad), jnp.float32),
        grid_spec=pltpu.PrefetchScalarGridSpec(
            num_scalar_prefetch=0,
            grid=(grid_m, n_layers),
            in_specs=[
                pl.BlockSpec((tm, d_pad), lambda b, l: (b, 0)),          # x
                pl.BlockSpec((1, d_pad, d_pad), lambda b, l: (l, 0, 0)),  # W_l
                pl.BlockSpec((1, 1, d_pad), lambda b, l: (l, 0, 0)),      # b_l
            ],
            out_specs=pl.BlockSpec((tm, d_out_pad), lambda b, l: (b, 0)),
            scratch_shapes=[pltpu.VMEM((tm, d_pad), compute_dtype)],
        ),
        compiler_params=pltpu.CompilerParams(
            dimension_semantics=("parallel", "arbitrary"),
            vmem_limit_bytes=vmem_limit,
        ),
        cost_estimate=pl.CostEstimate(
            flops=flops, transcendentals=0, bytes_accessed=bytes_accessed),
    )(x_p, w_stk, b_stk)

    return out_pad[:m, :out_dim]


# --------------------------------------------------------------------------- #
# Init + demo.
# --------------------------------------------------------------------------- #
def init_mlp_params(key, layer_num, in_dim, hidden_dim, out_dim):
    """Deterministic xavier-uniform-ish init (initial='uniform', gain=True, bias=True)."""
    params = []
    for i in range(layer_num):
        if i == 0:
            d_in, d_out = in_dim, hidden_dim
        elif i == layer_num - 1:
            d_in, d_out = hidden_dim, out_dim
        else:
            d_in, d_out = hidden_dim, hidden_dim
        key, kw, kb = jax.random.split(key, 3)
        gain = jnp.sqrt(2.0)  # nn.init.calculate_gain('relu')
        limit = gain * jnp.sqrt(6.0 / (d_in + d_out))
        w = jax.random.uniform(kw, (d_in, d_out), jnp.float32, -limit, limit)
        b = jax.random.uniform(kb, (1, d_out), jnp.float32, -0.01, 0.01)
        params.append((w, b))
    return params


def _reference(x, params, layer_num, compute_dtype):
    """Pure-JAX reference on the same dtype path as the kernel."""
    h = x
    for i, (w, b) in enumerate(params):
        h = jnp.dot(h.astype(compute_dtype), w.astype(compute_dtype),
                    preferred_element_type=jnp.float32) + b
        if i != layer_num - 1:
            h = jnp.maximum(h, 0.0)
    return h


if __name__ == "__main__":
    layer_num, in_dim, hidden_dim, out_dim = 3, 32, 64, 16
    compute_dtype = jnp.bfloat16

    key = jax.random.PRNGKey(0)
    key, kx1, kx2 = jax.random.split(key, 3)
    params = init_mlp_params(key, layer_num, in_dim, hidden_dim, out_dim)

    # One-time param prep (padding / cast / stacking happens here, not per call).
    w_stk, b_stk, meta = prepare_mlp_params(params, compute_dtype)

    ok = True
    # Test 1: tiny batch (single batch tile).  Test 2: batch tiling exercised
    # by capping the tile size, so grid_m > 1 and the "parallel" axis is real.
    for x, tm_max in [(jax.random.normal(kx1, (8, in_dim), jnp.float32), 256),
                      (jax.random.normal(kx2, (40, in_dim), jnp.float32), 16)]:
        out = jax.block_until_ready(
            mlp_net_forward(x, w_stk, b_stk, out_dim=meta["out_dim"],
                            compute_dtype=compute_dtype, tm_max=tm_max))
        ref = _reference(x, params, layer_num, compute_dtype)
        assert out.shape == (x.shape[0], out_dim)
        tol = 1e-5 if compute_dtype == jnp.float32 else 2e-2
        if not jnp.allclose(out, ref, atol=tol, rtol=tol):
            ok = False
            print("MISMATCH", float(jnp.max(jnp.abs(out - ref))))
        # NOTE: bf16 MXU inputs drift slightly vs the true f32 PyTorch baseline;
        # pass compute_dtype=jnp.float32 for bit-faithful numerics.

    if ok:
        print("KERNEL_OK")
</pallas_src>

<mosaic_0001>
module attributes {stable_mosaic.version = 11 : i64} {
  func.func @_mlp_layer_kernel(%arg0: i32, %arg1: i32, %arg2: memref<16x128xbf16, #tpu.memory_space<vmem>>, %arg3: memref<1x128x128xbf16, #tpu.memory_space<vmem>>, %arg4: memref<1x1x128xf32, #tpu.memory_space<vmem>>, %arg5: memref<16x128xf32, #tpu.memory_space<vmem>>, %arg6: memref<16x128xbf16, #tpu.memory_space<vmem>>) attributes {dimension_semantics = [#tpu.dimension_semantics<parallel>, #tpu.dimension_semantics<arbitrary>], iteration_bounds = array<i64: 1, 3>, scalar_prefetch = 0 : i64, scratch_operands = 1 : i64, tpu.core_type = #tpu.core_type<tc>, window_params = [{transform_indices = @transform_0, window_bounds = array<i64: 16, 128>}, {transform_indices = @transform_1, window_bounds = array<i64: 1, 128, 128>}, {transform_indices = @transform_2, window_bounds = array<i64: 1, 1, 128>}, {transform_indices = @transform_3, window_bounds = array<i64: 16, 128>}]} {
    %c0_i32 = arith.constant 0 : i32
    %0 = arith.cmpi eq, %arg1, %c0_i32 : i32
    %1 = arith.extui %0 : i1 to i32
    %c0_i32_0 = arith.constant 0 : i32
    %2 = arith.cmpi ne, %1, %c0_i32_0 : i32
    scf.if %2 {
      %c0_11 = arith.constant 0 : index
      %c0_12 = arith.constant 0 : index
      %17 = vector.load %arg2[%c0_11, %c0_12] : memref<16x128xbf16, #tpu.memory_space<vmem>>, vector<16x128xbf16>
      %c0_13 = arith.constant 0 : index
      %c0_14 = arith.constant 0 : index
      %18 = vector.load %arg6[%c0_13, %c0_14] : memref<16x128xbf16, #tpu.memory_space<vmem>>, vector<16x128xbf16>
      tpu.vector_store %arg6[%c0_13, %c0_14], %17 {strides = array<i32>} : memref<16x128xbf16, #tpu.memory_space<vmem>>, vector<16x128xbf16>,
    } else {
    }
    %c0 = arith.constant 0 : index
    %c0_1 = arith.constant 0 : index
    %3 = vector.load %arg6[%c0, %c0_1] : memref<16x128xbf16, #tpu.memory_space<vmem>>, vector<16x128xbf16>
    %c0_2 = arith.constant 0 : index
    %c0_3 = arith.constant 0 : index
    %c0_4 = arith.constant 0 : index
    %4 = vector.load %arg3[%c0_2, %c0_3, %c0_4] : memref<1x128x128xbf16, #tpu.memory_space<vmem>>, vector<1x128x128xbf16>
    %5 = vector.shape_cast %4 : vector<1x128x128xbf16> to vector<128x128xbf16>
    %cst = arith.constant dense<0.000000e+00> : vector<16x128xf32>
    %6 = tpu.matmul %3, %5, %cst {dimension_numbers = #tpu.dot_dimension_numbers<[1], [0], [0], [1], [0, 0, 1, 1], [], []>} : vector<16x128xbf16>, vector<128x128xbf16>, vector<16x128xf32> -> vector<16x128xf32>
    %c0_5 = arith.constant 0 : index
    %c0_6 = arith.constant 0 : index
    %c0_7 = arith.constant 0 : index
    %7 = vector.load %arg4[%c0_5, %c0_6, %c0_7] : memref<1x1x128xf32, #tpu.memory_space<vmem>>, vector<1x1x128xf32>
    %8 = vector.shape_cast %7 : vector<1x1x128xf32> to vector<1x128xf32>
    %9 = vector.broadcast %8 : vector<1x128xf32> to vector<16x128xf32>
    %10 = arith.addf %6, %9 : vector<16x128xf32>
    %c2_i32 = arith.constant 2 : i32
    %11 = arith.cmpi ne, %arg1, %c2_i32 : i32
    %12 = arith.extui %11 : i1 to i32
    %c0_i32_8 = arith.constant 0 : i32
    %13 = arith.cmpi ne, %12, %c0_i32_8 : i32
    scf.if %13 {
      %cst_11 = arith.constant 0.000000e+00 : f32
      %17 = vector.broadcast %cst_11 : f32 to vector<16x128xf32>
      %18 = arith.maximumf %10, %17 : vector<16x128xf32>
      %19 = arith.truncf %18 : vector<16x128xf32> to vector<16x128xbf16>
      %c0_12 = arith.constant 0 : index
      %c0_13 = arith.constant 0 : index
      %20 = vector.load %arg6[%c0_12, %c0_13] : memref<16x128xbf16, #tpu.memory_space<vmem>>, vector<16x128xbf16>
      tpu.vector_store %arg6[%c0_12, %c0_13], %19 {strides = array<i32>} : memref<16x128xbf16, #tpu.memory_space<vmem>>, vector<16x128xbf16>,
    } else {
    }
    %c2_i32_9 = arith.constant 2 : i32
    %14 = arith.cmpi eq, %arg1, %c2_i32_9 : i32
    %15 = arith.extui %14 : i1 to i32
    %c0_i32_10 = arith.constant 0 : i32
    %16 = arith.cmpi ne, %15, %c0_i32_10 : i32
    scf.if %16 {
      %c0_11 = arith.constant 0 : index
      %c0_12 = arith.constant 0 : index
      %17 = vector.load %arg5[%c0_11, %c0_12] : memref<16x128xf32, #tpu.memory_space<vmem>>, vector<16x128xf32>
      tpu.vector_store %arg5[%c0_11, %c0_12], %10 {strides = array<i32>} : memref<16x128xf32, #tpu.memory_space<vmem>>, vector<16x128xf32>,
    } else {
    }
    return
  }
  func.func @transform_0(%arg0: i32, %arg1: i32) -> (i32, i32) {
    %c0_i32 = arith.constant 0 : i32
    %c0_i32_0 = arith.constant 0 : i32
    return %arg0, %c0_i32 : i32, i32
  }
  func.func @transform_1(%arg0: i32, %arg1: i32) -> (i32, i32, i32) {
    %c0_i32 = arith.constant 0 : i32
    %c0_i32_0 = arith.constant 0 : i32
    %c0_i32_1 = arith.constant 0 : i32
    return %arg1, %c0_i32, %c0_i32_0 : i32, i32, i32
  }
  func.func @transform_2(%arg0: i32, %arg1: i32) -> (i32, i32, i32) {
    %c0_i32 = arith.constant 0 : i32
    %c0_i32_0 = arith.constant 0 : i32
    %c0_i32_1 = arith.constant 0 : i32
    return %arg1, %c0_i32, %c0_i32_0 : i32, i32, i32
  }
  func.func @transform_3(%arg0: i32, %arg1: i32) -> (i32, i32) {
    %c0_i32 = arith.constant 0 : i32
    %c0_i32_0 = arith.constant 0 : i32
    return %arg0, %c0_i32 : i32, i32
  }
}

</mosaic_0001>

<llo_original>
// kernel: mlp_net_forward.1
$region0: #{mlp_net_forward.1}
  #allocation0 [shape = 'u32[]', space=smem, size = 0x4, offset = 0x4, fixed_abs, tag = 'smem constant byte address 0x4 - core index']
  #allocation1 [shape = 'u32[144,128]{1,0:T(1,128)}', space=vmem, size = 0x12000, scoped, tag = 'internal scratch']
  #allocation2 [shape = 'bf16[16,128]{1,0:T(16,128)(2,1)}', space=vmem, size = 0x1000, scoped, tag = 'scratch operand']
  %s0 = inlined_call_operand.vmem [shape: bf16[16,128], index: 0, kind: input, shape index: {}]
  %s1 = inlined_call_operand.hbm [shape: bf16[3,128,128], index: 1, kind: input, shape index: {}]
  %s2 = inlined_call_operand.vmem [shape: f32[3,1,128], index: 2, kind: input, shape index: {}]
  %s3 = inlined_call_operand.vmem [shape: f32[16,128], index: 3, kind: output, shape index: {}]
  %s4 = sld [smem:[#allocation0]]
  $region61: #{mlp_net_forward.1} parent=0
    _
  %s6 = ssub.s32 1, %s4
  %s7 = scalar_select 0, %s6, %s4
  $region1: #{mlp_net_forward.1} parent=0
    #allocation3 [shape = 'u8[65536]{0}', space=vmem, size = 0x10000, scoped, tag = 'input window, operand 1']
    #allocation4 [shape = 's32[2]{0}', space=sflag, size = 0x8, scoped, tag = 'scoped memory for mlp_net_forward.1']
    %8 = vsyncpa [#allocation4], 0
    %s9 = scalar_lea.sflag [#allocation4], 1
    %10 = vsyncpa %s9, 0
    loop: start=0, step=1, limit=5
    $region2: #{mlp_net_forward.1} parent=1 // loop_pre_header
      _
    $region3: #{mlp_net_forward.1} parent=1 // loop_header
      %s12 = sphi 0, %s16
      %p13 = scmp.ge.s32.totalorder %s12, 5
      %s19 = sphi 0, %s31
      %s20 = sphi 0, %s27
      %s21 = sphi 0, %s19
      %s22 = sphi 0, %s20
      %s23 = sphi 0, %s21
      %s24 = sphi 0, %s22
      %s34 = sphi 0, %s36
      %s37 = sphi 0, %s34
      %s38 = sphi 0, %s37
      %s54 = sphi 0, %s38
      %s60 = sphi 0, %s62
      %s63 = sphi 0, %s60
      %s64 = sphi 0, %s63
      %s80 = sphi 0, %s64
      %s86 = sphi 0, %s88
      %s89 = sphi 0, %s86
      %s90 = sphi 0, %s89
      %s106 = sphi 0, %s90
      %s112 = sphi 0, %s114
      %s115 = sphi 0, %s112
      %s116 = sphi 0, %s115
      %s132 = sphi 0, %s116
    $region4: #{mlp_net_forward.1} parent=1 // loop_header_branch
      %15 = sbr.rel (%p13) target = $region8
    $region5: #{mlp_net_forward.1} parent=1 // loop_body
      %s17 = ssub.s32 %s12, 1
      %s18 = ssub.s32 %s12, 2
      %s25 = sadd.s32 1, %s20
      %p26 = scmp.ge.s32.totalorder %s25, 3
      %s27 = scalar_select %p26, 0, %s25
      %s28 = sadd.s32 1, %s19
      %s29 = scalar_select %p26, %s28, %s19
      %p30 = scmp.ge.s32.totalorder %s29, 1
      %s31 = scalar_select %p30, 0, %s29
      %s32 = ssub.s32 %s19, %s31
      %p33 = scmp.eq.s32.totalorder %s32, 0
      %s35 = sadd.s32 %s34, 1
      %s36 = scalar_select %p33, %s34, %s35
      %p39 = pneg %p33
      %p40 = scmp.eq.s32.totalorder %s12, 2
      %p41 = por %p39, %p40
      %p42 = scmp.ne.s32.totalorder %s34, %s37
      %p43 = scmp.eq.s32.totalorder %s12, 0
      %p44 = por %p42, %p43
      %p45 = scmp.ne.s32.totalorder %s34, %s37
      %p46 = scmp.eq.s32.totalorder %s17, 2
      %p47 = por %p45, %p46
      %p48 = scmp.ne.s32.totalorder %s37, %s38
      %p49 = scmp.eq.s32.totalorder %s17, 0
      %p50 = por %p48, %p49
      %p51 = scmp.ne.s32.totalorder %s37, %s38
      %p52 = scmp.eq.s32.totalorder %s18, 2
      %p53 = por %p51, %p52
      %p55 = scmp.ne.s32.totalorder %s38, %s54
      %p56 = scmp.eq.s32.totalorder %s18, 0
      %p57 = por %p55, %p56
      %s58 = ssub.s32 %s20, %s27
      %p59 = scmp.eq.s32.totalorder %s58, 0
      %s61 = sadd.s32 %s60, 1
      %s62 = scalar_select %p59, %s60, %s61
      %p65 = pneg %p59
      %p66 = scmp.eq.s32.totalorder %s12, 2
      %p67 = por %p65, %p66
      %p68 = scmp.ne.s32.totalorder %s60, %s63
      %p69 = scmp.eq.s32.totalorder %s12, 0
      %p70 = por %p68, %p69
      %p71 = scmp.ne.s32.totalorder %s60, %s63
      %p72 = scmp.eq.s32.totalorder %s17, 2
      %p73 = por %p71, %p72
      %p74 = scmp.ne.s32.totalorder %s63, %s64
      %p75 = scmp.eq.s32.totalorder %s17, 0
      %p76 = por %p74, %p75
      %p77 = scmp.ne.s32.totalorder %s63, %s64
      %p78 = scmp.eq.s32.totalorder %s18, 2
      %p79 = por %p77, %p78
      %p81 = scmp.ne.s32.totalorder %s64, %s80
      %p82 = scmp.eq.s32.totalorder %s18, 0
      %p83 = por %p81, %p82
      %s84 = ssub.s32 %s20, %s27
      %p85 = scmp.eq.s32.totalorder %s84, 0
      %s87 = sadd.s32 %s86, 1
      %s88 = scalar_select %p85, %s86, %s87
      %p91 = pneg %p85
      %p92 = scmp.eq.s32.totalorder %s12, 2
      %p93 = por %p91, %p92
      %p94 = scmp.ne.s32.totalorder %s86, %s89
      %p95 = scmp.eq.s32.totalorder %s12, 0
      %p96 = por %p94, %p95
      %p97 = scmp.ne.s32.totalorder %s86, %s89
      %p98 = scmp.eq.s32.totalorder %s17, 2
      %p99 = por %p97, %p98
      %p100 = scmp.ne.s32.totalorder %s89, %s90
      %p101 = scmp.eq.s32.totalorder %s17, 0
      %p102 = por %p100, %p101
      %p103 = scmp.ne.s32.totalorder %s89, %s90
      %p104 = scmp.eq.s32.totalorder %s18, 2
      %p105 = por %p103, %p104
      %p107 = scmp.ne.s32.totalorder %s90, %s106
      %p108 = scmp.eq.s32.totalorder %s18, 0
      %p109 = por %p107, %p108
      %s110 = ssub.s32 %s19, %s31
      %p111 = scmp.eq.s32.totalorder %s110, 0
      %s113 = sadd.s32 %s112, 1
      %s114 = scalar_select %p111, %s112, %s113
      %p117 = pneg %p111
      %p118 = scmp.eq.s32.totalorder %s12, 2
      %p119 = por %p117, %p118
      %p120 = scmp.ne.s32.totalorder %s112, %s115
      %p121 = scmp.eq.s32.totalorder %s12, 0
      %p122 = por %p120, %p121
      %p123 = scmp.ne.s32.totalorder %s112, %s115
      %p124 = scmp.eq.s32.totalorder %s17, 2
      %p125 = por %p123, %p124
      %p126 = scmp.ne.s32.totalorder %s115, %s116
      %p127 = scmp.eq.s32.totalorder %s17, 0
      %p128 = por %p126, %p127
      %p129 = scmp.ne.s32.totalorder %s115, %s116
      %p130 = scmp.eq.s32.totalorder %s18, 2
      %p131 = por %p129, %p130
      %p133 = scmp.ne.s32.totalorder %s116, %s132
      %p134 = scmp.eq.s32.totalorder %s18, 0
      %p135 = por %p133, %p134
      %p136 = scmp.le.s32.totalorder 1, %s12
      %p137 = scmp.lt.s32.totalorder %s12, 4
      %p138 = pnand %p136, %p137
      %p139 = pneg %p138
      // Predicated region
      $region9: #{mlp_net_forward.1} parent=5 // pred_check
        _
      $region10: #{mlp_net_forward.1} parent=5 // pred_check_branch
        %141 = sbr.rel (%p138) target = $region12
      $region11: #{mlp_net_forward.1} parent=5 // pred_region
        %s142 = ssub.s32 %s12, 1
        // Predicated region
        $region13: #{mlp_net_forward.1} parent=11 // pred_check
          %p143 = pneg %p50
        $region14: #{mlp_net_forward.1} parent=11 // pred_check_branch
          %145 = sbr.rel (%p143) target = $region16
        $region15: #{mlp_net_forward.1} parent=11 // pred_region
          %s146 = smul.u32 2, %s21
          %p147 = scmp.lt.s32.totalorder %s146, 1
          %s148 = scalar_select %p147, %s146, 1
          %s149 = smul.addr %s148, 4
          %s150 = scalar_lea.vmem %s0, %s149
          %s151 = smul.u32 2, %s21
        $region16: #{mlp_net_forward.1} parent=11 // pred_fallthru
          _
      $region12: #{mlp_net_forward.1} parent=5 // pred_fallthru
        _
      %p152 = scmp.lt.s32.totalorder %s12, 3
      // Predicated region
      $region17: #{mlp_net_forward.1} parent=5 // pred_check
        %p153 = pneg %p152
      $region18: #{mlp_net_forward.1} parent=5 // pred_check_branch
        %155 = sbr.rel (%p153) target = $region20
      $region19: #{mlp_net_forward.1} parent=5 // pred_region
        // Predicated region
        $region21: #{mlp_net_forward.1} parent=19 // pred_check
          %p156 = pneg %p70
        $region22: #{mlp_net_forward.1} parent=19 // pred_check_branch
          %158 = sbr.rel (%p156) target = $region24
        $region23: #{mlp_net_forward.1} parent=19 // pred_region
          %s159 = sand.u32 %s60, 1
          %s160 = scalar_lea.sflag [#allocation4], %s159
          %s161 = sand.u32 %s60, 1
          %s162 = smul.addr %s161, 64
          %s163 = scalar_lea.vmem [#allocation3], %s162
          %s165 = ssub.s32 1024, 1024
          %166 = vsyncadd %s160, %s165
          %s167 = smul.addr %s20, 16
          %s168 = smul.addr %s167, 64
          %s169 = scalar_lea.hbm %s1, %s168
          %s170 = sshll.u32 %s163, 4
          %s171 = int_to_ptr.vmem [resolvable:$true] %s170
          %176 = dma.hbm_to_vmem [thread:$0]  %s169, 1024, %s171, %s160, 64, 64, 4
        $region24: #{mlp_net_forward.1} parent=19 // pred_fallthru
          _
        // Predicated region
        $region25: #{mlp_net_forward.1} parent=19 // pred_check
          %p177 = pneg %p96
        $region26: #{mlp_net_forward.1} parent=19 // pred_check_branch
          %179 = sbr.rel (%p177) target = $region28
        $region27: #{mlp_net_forward.1} parent=19 // pred_region
          %p180 = scmp.lt.s32.totalorder %s20, 2
          %s181 = scalar_select %p180, %s20, 2
          %s182 = scalar_lea.vmem %s2, %s181
        $region28: #{mlp_net_forward.1} parent=19 // pred_fallthru
          _
      $region20: #{mlp_net_forward.1} parent=5 // pred_fallthru
        _
      %p183 = scmp.le.s32.totalorder 1, %s12
      %p184 = scmp.lt.s32.totalorder %s12, 4
      %p185 = pnand %p183, %p184
      %p186 = pneg %p185
      // Predicated region
      $region29: #{mlp_net_forward.1} parent=5 // pred_check
        _
      $region30: #{mlp_net_forward.1} parent=5 // pred_check_branch
        %188 = sbr.rel (%p185) target = $region32
      $region31: #{mlp_net_forward.1} parent=5 // pred_region
        %s189 = ssub.s32 %s12, 1
        %s190 = sand.u32 %s63, 1
        %s191 = scalar_lea.sflag [#allocation4], %s190
        %s192 = sand.u32 %s63, 1
        %s193 = smul.addr %s192, 64
        %s194 = scalar_lea.vmem [#allocation3], %s193
        // Predicated region
        $region33: #{mlp_net_forward.1} parent=31 // pred_check
          %p195 = pneg %p76
        $region34: #{mlp_net_forward.1} parent=31 // pred_check_branch
          %197 = sbr.rel (%p195) target = $region36
        $region35: #{mlp_net_forward.1} parent=31 // pred_region
          %198 = dma.done %s191, 1024
        $region36: #{mlp_net_forward.1} parent=31 // pred_fallthru
          _
        %s199 = smul.u32 2, %s21
        %p200 = scmp.lt.s32.totalorder %s199, 1
        %s201 = scalar_select %p200, %s199, 1
        %s202 = smul.addr %s201, 4
        %s203 = scalar_lea.vmem %s0, %s202
        %p204 = pneg %p50
        %p205 = pneg %p47
        %s206 = sand.u32 %s63, 1
        %s207 = scalar_lea.sflag [#allocation4], %s206
        %s208 = sand.u32 %s63, 1
        %s209 = smul.addr %s208, 64
        %s210 = scalar_lea.vmem [#allocation3], %s209
        %p211 = pneg %p76
        %p212 = pneg %p73
        %p213 = scmp.lt.s32.totalorder %s22, 2
        %s214 = scalar_select %p213, %s22, 2
        %s215 = scalar_lea.vmem %s2, %s214
        %p216 = pneg %p102
        %p217 = pneg %p99
        %p218 = pneg %p128
        %p219 = pneg %p125
        %s220 = smul.u32 2, %s21
        %p221 = scmp.lt.s32.totalorder %s220, 1
        %s222 = scalar_select %p221, %s220, 1
        %s223 = smul.addr %s222, 8
        %s224 = scalar_lea.vmem %s3, %s223
        %s225 = smul.u32 2, %s21
        %p226 = scmp.lt.s32.totalorder %s225, 1
        %s227 = scalar_select %p226, %s225, 1
        %s228 = smul.addr %s227, 4
        %s229 = scalar_lea.vmem %s0, %s228
        %s230 = smul.u32 2, %s21
        %p231 = scmp.lt.s32.totalorder %s22, 2
        %s232 = scalar_select %p231, %s22, 2
        %s233 = scalar_lea.vmem %s2, %s232
        %s234 = smul.u32 2, %s21
        %p235 = scmp.lt.s32.totalorder %s234, 1
        %s236 = scalar_select %p235, %s234, 1
        %s237 = smul.addr %s236, 8
        %s238 = scalar_lea.vmem %s3, %s237
        %s239 = smul.u32 2, %s21
        %p241 = scmp.eq.s32.totalorder %s22, 0
        // Predicated region
        $region37: #{mlp_net_forward.1} parent=31 // pred_check
          %p242 = pneg %p241
        $region38: #{mlp_net_forward.1} parent=31 // pred_check_branch
          %244 = sbr.rel (%p242) target = $region40
        $region39: #{mlp_net_forward.1} parent=31 // pred_region
          %v245 = vld [vmem:[%s229] sm:$0xf]
          %v246 = vld [vmem:[%s229 + $0x4] sm:$0xf]
          %v249 = vunpack.c.l.b16 %v245
          %v250 = vunpack.c.l.b16 %v246
          %v251 = vpack.c.b16 %v250, %v249
          %253 = vst [vmem:[#allocation2] sm:$0xff] %v251
        $region40: #{mlp_net_forward.1} parent=31 // pred_fallthru
          _
        %v254 = vld [vmem:[#allocation2] sm:$0xff]
        %v255 = vld [vmem:[%s194] sm:$0xf]
        %v256 = vld [vmem:[%s194 + $0x4] sm:$0xf]
        %v257 = vld [vmem:[%s194 + $0x8] sm:$0xf]
        %v258 = vld [vmem:[%s194 + $0xc] sm:$0xf]
        %v259 = vld [vmem:[%s194 + $0x10] sm:$0xf]
        %v260 = vld [vmem:[%s194 + $0x14] sm:$0xf]
        %v261 = vld [vmem:[%s194 + $0x18] sm:$0xf]
        %v262 = vld [vmem:[%s194 + $0x1c] sm:$0xf]
        %v263 = vld [vmem:[%s194 + $0x20] sm:$0xf]
        %v264 = vld [vmem:[%s194 + $0x24] sm:$0xf]
        %v265 = vld [vmem:[%s194 + $0x28] sm:$0xf]
        %v266 = vld [vmem:[%s194 + $0x2c] sm:$0xf]
        %v267 = vld [vmem:[%s194 + $0x30] sm:$0xf]
        %v268 = vld [vmem:[%s194 + $0x34] sm:$0xf]
        %v269 = vld [vmem:[%s194 + $0x38] sm:$0xf]
        %v270 = vld [vmem:[%s194 + $0x3c] sm:$0xf]
        %v271 = vld [vmem:[%s233] sm:$0x1]
        %v273 = vlaneseq
        %v274 = vshrl.u32 %v273, 7
        %v275 = vsub.s32 0, %v274
        %v276 = vrot.slane %v271, %v275
        %v294 = vunpack.c.l.b16 %v255
        %v295 = vunpack.c.l.b16 %v256
        %v296 = vunpack.c.l.b16 %v257
        %v297 = vunpack.c.l.b16 %v258
        %v298 = vunpack.c.l.b16 %v259
        %v299 = vunpack.c.l.b16 %v260
        %v300 = vunpack.c.l.b16 %v261
        %v301 = vunpack.c.l.b16 %v262
        %v302 = vunpack.c.l.b16 %v263
        %v303 = vunpack.c.l.b16 %v264
        %v304 = vunpack.c.l.b16 %v265
        %v305 = vunpack.c.l.b16 %v266
        %v306 = vunpack.c.l.b16 %v267
        %v307 = vunpack.c.l.b16 %v268
        %v308 = vunpack.c.l.b16 %v269
        %v309 = vunpack.c.l.b16 %v270
        %v310 = vpack.c.b16 %v295, %v294
        %v311 = vpack.c.b16 %v297, %v296
        %v312 = vpack.c.b16 %v299, %v298
        %v313 = vpack.c.b16 %v301, %v300
        %v314 = vpack.c.b16 %v303, %v302
        %v315 = vpack.c.b16 %v305, %v304
        %v316 = vpack.c.b16 %v307, %v306
        %v317 = vpack.c.b16 %v309, %v308
        %326 = vmatprep.subr.bf16.mxu0 0
        %327 = vmatpush1.bf16.msra.mxu0 %v310
        %328 = vmatprep.subr.bf16.mxu0 0
        %329 = vmatpush1.bf16.msra.mxu0 %v311
        %330 = vmatprep.subr.bf16.mxu0 0
        %331 = vmatpush1.bf16.msra.mxu0 %v312
        %332 = vmatprep.subr.bf16.mxu0 0
        %333 = vmatpush1.bf16.msra.mxu0 %v313
        %334 = vmatprep.subr.bf16.mxu0 0
        %335 = vmatpush1.bf16.msra.mxu0 %v314
        %336 = vmatprep.subr.bf16.mxu0 0
        %337 = vmatpush1.bf16.msra.mxu0 %v315
        %338 = vmatprep.subr.bf16.mxu0 0
        %339 = vmatpush1.bf16.msra.mxu0 %v316
        %340 = vmatprep.subr.bf16.mxu0 0
        %341 = vmatpush1.bf16.msra.mxu0 %v317
        %342 = vmatprep.subr.bf16.mxu0 0
        %343 = vmatpush1.bf16.msra.mxu0 0
        %344 = vmatprep.subr.bf16.mxu0 0
        %345 = vmatpush1.bf16.msra.mxu0 0
        %346 = vmatprep.subr.bf16.mxu0 0
        %347 = vmatpush1.bf16.msra.mxu0 0
        %348 = vmatprep.subr.bf16.mxu0 0
        %349 = vmatpush1.bf16.msra.mxu0 0
        %350 = vmatprep.subr.bf16.mxu0 0
        %351 = vmatpush1.bf16.msra.mxu0 0
        %352 = vmatprep.subr.bf16.mxu0 0
        %353 = vmatpush1.bf16.msra.mxu0 0
        %354 = vmatprep.subr.bf16.mxu0 0
        %355 = vmatpush1.bf16.msra.mxu0 0
        %356 = vmatprep.subr.bf16.mxu0 0
        %357 = vmatpush1.bf16.msra.mxu0 0
        %358 = vmatprep.mubr.bf16.mxu0 0
        %359 = vmatmul.mubr.bf16.gmra.mrb[0].mxu0 %v254
        %v360 = vpop.f32.mrb[0].mxu0
        %v361 = vadd.f32 %v276, %v360
        %v362 = vpop.f32.mrb[0].mxu0
        %v363 = vpop.f32.mrb[0].mxu0
        %v364 = vadd.f32 %v276, %v363
        %v365 = vpop.f32.mrb[0].mxu0
        %366 = vdwg.mxu0
        %p367 = scmp.ne.s32.totalorder %s22, 2
        // Predicated region
        $region41: #{mlp_net_forward.1} parent=31 // pred_check
          %p368 = pneg %p367
        $region42: #{mlp_net_forward.1} parent=31 // pred_check_branch
          %370 = sbr.rel (%p368) target = $region44
        $region43: #{mlp_net_forward.1} parent=31 // pred_region
          %v371 = vmax.f32 %v361, 0.0
          %v372 = vmax.f32 %v364, 0.0
          %v373 = vpack.c.bf16 %v372, %v371
          %374 = vst [vmem:[#allocation2] sm:$0xff] %v373
        $region44: #{mlp_net_forward.1} parent=31 // pred_fallthru
          _
        %p375 = scmp.eq.s32.totalorder %s22, 2
        // Predicated region
        $region45: #{mlp_net_forward.1} parent=31 // pred_check
          %p376 = pneg %p375
        $region46: #{mlp_net_forward.1} parent=31 // pred_check_branch
          %378 = sbr.rel (%p376) target = $region48
        $region47: #{mlp_net_forward.1} parent=31 // pred_region
          %379 = vst [vmem:[%s238] sm:$0xff] %v361
          %380 = vst [vmem:[%s238 + $0x8] sm:$0xff] %v364
        $region48: #{mlp_net_forward.1} parent=31 // pred_fallthru
          _
        %s381 = smul.u32 2, %s21
        %p382 = scmp.lt.s32.totalorder %s381, 1
        %s383 = scalar_select %p382, %s381, 1
        %s384 = smul.addr %s383, 8
        %s385 = scalar_lea.vmem %s3, %s384
        // Predicated region
        $region49: #{mlp_net_forward.1} parent=31 // pred_check
          %p386 = pneg %p125
        $region50: #{mlp_net_forward.1} parent=31 // pred_check_branch
          %388 = sbr.rel (%p386) target = $region52
        $region51: #{mlp_net_forward.1} parent=31 // pred_region
          %s389 = smul.u32 2, %s21
        $region52: #{mlp_net_forward.1} parent=31 // pred_fallthru
          _
        // Predicated region
        $region53: #{mlp_net_forward.1} parent=31 // pred_check
          %p390 = pneg %p125
        $region54: #{mlp_net_forward.1} parent=31 // pred_check_branch
          %392 = sbr.rel (%p390) target = $region56
        $region55: #{mlp_net_forward.1} parent=31 // pred_region
          %s393 = smul.u32 2, %s21
          %p394 = scmp.lt.s32.totalorder %s393, 1
          %s395 = scalar_select %p394, %s393, 1
          %s396 = smul.addr %s395, 8
          %s397 = scalar_lea.vmem %s3, %s396
        $region56: #{mlp_net_forward.1} parent=31 // pred_fallthru
          _
      $region32: #{mlp_net_forward.1} parent=5 // pred_fallthru
        _
      %p398 = scmp.le.s32.totalorder 2, %s12
      // Predicated region
      $region57: #{mlp_net_forward.1} parent=5 // pred_check
        %p399 = pneg %p398
      $region58: #{mlp_net_forward.1} parent=5 // pred_check_branch
        %401 = sbr.rel (%p399) target = $region60
      $region59: #{mlp_net_forward.1} parent=5 // pred_region
        %s402 = ssub.s32 %s12, 2
      $region60: #{mlp_net_forward.1} parent=5 // pred_fallthru
        _
    $region6: #{mlp_net_forward.1} parent=1 // loop_footer
      %s16 = sadd.s32 1, %s12
    $region7: #{mlp_net_forward.1} parent=1 // loop_footer_branch
      %11 = sbr.rel target = $region3
    $region8: #{mlp_net_forward.1} parent=1 // loop_exit
      _
    %403 = vsyncpa [#allocation4], 1
    %s404 = scalar_lea.sflag [#allocation4], 1
    %405 = vsyncpa %s404, 1

</llo_original>
